<compile_context>
chip_gen: v5e
topology: v5e:2x2
jax: 0.10.0
libtpu: 0.0.40
codegen_flags: <defaults>
</compile_context>

<pallas_src>
import jax
import jax.numpy as jnp
from jax.experimental import pallas as pl
from jax.experimental.pallas import tpu as pltpu

H_IN = 50          # true hidden width of the PyTorch module
HP = 64            # hidden dim padded 50 -> 64 (multiple of the 8-sublane tile)
BIAS_CH = 50       # padded channel carrying a constant 1 (bias folding)
TILE_N = 2048      # batch tile (multiple of 128); sweep 2048-8192 per gen


def _mlp_kernel(xT_ref, w1_ref, b1_ref, w2_ref, w3_ref, w4_ref, o_ref):
    """4-layer MLP on one batch tile; batch on the lane axis, biases folded."""
    xT = xT_ref[...]                                        # [1, TILE_N]

    # Layer 1 (Linear(1,50)): K=1 matmul wastes the MXU -> VPU broadcast
    # outer product. Channel BIAS_CH has w1c=0, b1c=1 -> stays exactly 1
    # after ReLU and carries the folded biases through layers 2-4.
    h = jnp.maximum(w1_ref[...] * xT + b1_ref[...], 0.0)    # [HP, TILE_N] f32

    # Layers 2/3 (Linear(50,50), padded to HPxHP): PyTorch [out,in] layout so
    # transposed activations need W @ h directly. Biases live in column
    # BIAS_CH of the padded weights (constant-1 channel), so no VPU bias add.
    # If weights were prepared in bf16, cast the activation operand too
    # (f32 accumulate via preferred_element_type).
    wdt = w2_ref.dtype
    h = jnp.maximum(
        jnp.dot(w2_ref[...], h.astype(wdt), preferred_element_type=jnp.float32),
        0.0)
    h = jnp.maximum(
        jnp.dot(w3_ref[...], h.astype(wdt), preferred_element_type=jnp.float32),
        0.0)

    # Layer 4 (Linear(50,1)): M=1 matmul is degenerate on the MXU ->
    # elementwise multiply (VPU) + sublane reduction (XLU). b4 is folded into
    # w4c[BIAS_CH] (constant-1 channel), so no scalar bias add either.
    o_ref[...] = jnp.sum(w4_ref[...] * h, axis=0,
                         keepdims=True).astype(o_ref.dtype)  # [1, TILE_N]


def _pad_params(p, *, use_bf16=False):
    """PyTorch-layout params -> padded, transposed, bias-folded kernel params."""
    mm_dtype = jnp.bfloat16 if use_bf16 else jnp.float32

    def col(v):                                   # [k] / [k,1] -> [HP, 1], zero pad
        v = jnp.asarray(v, jnp.float32).reshape(-1)
        return jnp.zeros((HP, 1), jnp.float32).at[:v.shape[0], 0].set(v)

    # Layer 1: channel BIAS_CH gets w=0, b=1 -> ReLU output is exactly 1.
    w1c = col(p["w1"])                                        # [HP,1]
    b1c = col(p["b1"]).at[BIAS_CH, 0].set(1.0)                # [HP,1]

    def fold_square(w, b):
        m = jnp.zeros((HP, HP), jnp.float32)
        m = m.at[:H_IN, :H_IN].set(jnp.asarray(w, jnp.float32))
        m = m.at[:H_IN, BIAS_CH].set(jnp.asarray(b, jnp.float32))  # bias via 1-chan
        m = m.at[BIAS_CH, BIAS_CH].set(1.0)                        # keep 1 alive
        return m.astype(mm_dtype)

    w2 = fold_square(p["w2"], p["b2"])                        # [HP,HP]
    w3 = fold_square(p["w3"], p["b3"])                        # [HP,HP]

    # Layer 4: output weights on sublanes, b4 folded into the constant-1 channel.
    w4c = col(p["w4"].reshape(-1)).at[BIAS_CH, 0].set(
        jnp.asarray(p["b4"], jnp.float32).reshape(()))        # [HP,1]

    return {"w1c": w1c, "b1c": b1c, "w2": w2, "w3": w3, "w4c": w4c}


def with_relu_forward(x, params, *, tile_n=TILE_N, use_bf16=False):
    """x: [N, 1] float32. params: PyTorch-layout dict from init_params."""
    n = int(x.shape[0])

    # Tile selection: shrink to the work available, but keep >= 2 tiles when
    # there is enough work so v7x's 2 TensorCores both get grid steps.
    n_pad128 = pl.cdiv(n, 128) * 128
    tile_n = min(int(tile_n), n_pad128)
    if n_pad128 >= 2 * 128 and pl.cdiv(n_pad128, tile_n) < 2:
        tile_n = pl.cdiv(n_pad128 // 2, 128) * 128
    n_tiles = pl.cdiv(n_pad128, tile_n)
    n_pad = n_tiles * tile_n

    # Batch-on-lanes: single lane-dense [1, n_pad] row (plain pad, no
    # zeros + dynamic-update-slice pass).
    xT = jnp.pad(x.reshape(1, -1).astype(jnp.float32), ((0, 0), (0, n_pad - n)))

    kp = _pad_params(params, use_bf16=use_bf16)
    args = (xT, kp["w1c"], kp["b1c"], kp["w2"], kp["w3"], kp["w4c"])

    def const_spec(shape):
        # Same block index every grid step -> DMA'd once, stays VMEM-resident.
        # `shape` is a function argument, so each spec closes over its own value.
        return pl.BlockSpec(shape, lambda i: (0,) * len(shape))

    in_specs = [pl.BlockSpec((1, tile_n), lambda i: (0, i))]    # xT tile
    in_specs += [const_spec(a.shape) for a in args[1:]]         # weights/biases

    weight_bytes = sum(int(a.size) * a.dtype.itemsize for a in args[1:])
    out = pl.pallas_call(
        _mlp_kernel,
        out_shape=jax.ShapeDtypeStruct((1, n_pad), jnp.float32),
        grid=(n_tiles,),
        in_specs=in_specs,
        out_specs=pl.BlockSpec((1, tile_n), lambda i: (0, i)),
        compiler_params=pltpu.CompilerParams(
            dimension_semantics=("parallel",),
            # ~5 live [HP,tile_n] f32 intermediates + double-buffered lane-dense
            # I/O tiles + resident weights, with generous headroom; capped at
            # 32 MiB (<= default scoped limit on v6e/v7x, < v7x 64 MiB phys).
            vmem_limit_bytes=min(32 << 20,
                                 8 * HP * tile_n * 4 + 16 * tile_n * 4
                                 + weight_bytes + (2 << 20))),
        cost_estimate=pl.CostEstimate(
            flops=int(n_pad) * (4 * HP + 4 * HP * HP),
            transcendentals=0,
            bytes_accessed=4 * 2 * int(n_pad) + weight_bytes),
    )(*args)

    return out[0, :n].reshape(n, 1)


def init_params(key):
    """PyTorch nn.Linear default init: W [out,in], b [out], U(-1/sqrt(fan_in), +)."""
    ks = jax.random.split(key, 8)

    def linear(kw, kb, fan_in, fan_out):
        bound = 1.0 / (fan_in ** 0.5)
        w = jax.random.uniform(kw, (fan_out, fan_in), jnp.float32, -bound, bound)
        b = jax.random.uniform(kb, (fan_out,), jnp.float32, -bound, bound)
        return w, b

    w1, b1 = linear(ks[0], ks[1], 1, 50)
    w2, b2 = linear(ks[2], ks[3], 50, 50)
    w3, b3 = linear(ks[4], ks[5], 50, 50)
    w4, b4 = linear(ks[6], ks[7], 50, 1)
    return {"w1": w1, "b1": b1, "w2": w2, "b2": b2,
            "w3": w3, "b3": b3, "w4": w4, "b4": b4}


def _reference(x, p):
    h = jnp.maximum(x @ p["w1"].T + p["b1"], 0.0)
    h = jnp.maximum(h @ p["w2"].T + p["b2"], 0.0)
    h = jnp.maximum(h @ p["w3"].T + p["b3"], 0.0)
    return h @ p["w4"].T + p["b4"]


if __name__ == "__main__":
    key = jax.random.PRNGKey(0)
    k_param, k_x = jax.random.split(key)
    params = init_params(k_param)

    # Small batch of scalar inputs, shape [N, 1] like the PyTorch module expects.
    x = jax.random.normal(k_x, (8, 1), jnp.float32)
    ref = _reference(x, params)

    # f32 path: numerically faithful (bias folding + zero padding are exact
    # through ReLU up to MXU accumulation order).
    out = jax.block_until_ready(with_relu_forward(x, params))
    assert out.shape == (8, 1)
    assert jnp.allclose(out, ref, atol=1e-5, rtol=1e-5), (
        f"f32 max abs err {jnp.max(jnp.abs(out - ref))}")

    # bf16 MXU-operand path (v5e/v6e throughput option): looser tolerance.
    out_bf16 = jax.block_until_ready(
        with_relu_forward(x, params, use_bf16=True))
    assert jnp.allclose(out_bf16, ref, atol=3e-2, rtol=3e-2), (
        f"bf16 max abs err {jnp.max(jnp.abs(out_bf16 - ref))}")

    # Exercise the multi-tile / tile-splitting path as well.
    x_big = jax.random.normal(k_x, (300, 1), jnp.float32)
    out_big = jax.block_until_ready(with_relu_forward(x_big, params, tile_n=256))
    assert jnp.allclose(out_big, _reference(x_big, params), atol=1e-5, rtol=1e-5)

    print("KERNEL_OK")
</pallas_src>

<mosaic_0001>
module attributes {stable_mosaic.version = 11 : i64} {
  func.func @_mlp_kernel(%arg0: i32, %arg1: memref<1x128xf32, #tpu.memory_space<vmem>>, %arg2: memref<64x1xf32, #tpu.memory_space<vmem>>, %arg3: memref<64x1xf32, #tpu.memory_space<vmem>>, %arg4: memref<64x64xf32, #tpu.memory_space<vmem>>, %arg5: memref<64x64xf32, #tpu.memory_space<vmem>>, %arg6: memref<64x1xf32, #tpu.memory_space<vmem>>, %arg7: memref<1x128xf32, #tpu.memory_space<vmem>>) attributes {dimension_semantics = [#tpu.dimension_semantics<parallel>], iteration_bounds = array<i64: 1>, scalar_prefetch = 0 : i64, scratch_operands = 0 : i64, tpu.core_type = #tpu.core_type<tc>, window_params = [{transform_indices = @transform_0, window_bounds = array<i64: 1, 128>}, {pipeline_mode = #tpu.pipeline_mode<synchronous>, transform_indices = @transform_1, window_bounds = array<i64: 64, 1>}, {pipeline_mode = #tpu.pipeline_mode<synchronous>, transform_indices = @transform_2, window_bounds = array<i64: 64, 1>}, {pipeline_mode = #tpu.pipeline_mode<synchronous>, transform_indices = @transform_3, window_bounds = array<i64: 64, 64>}, {pipeline_mode = #tpu.pipeline_mode<synchronous>, transform_indices = @transform_4, window_bounds = array<i64: 64, 64>}, {pipeline_mode = #tpu.pipeline_mode<synchronous>, transform_indices = @transform_5, window_bounds = array<i64: 64, 1>}, {transform_indices = @transform_6, window_bounds = array<i64: 1, 128>}]} {
    %c0 = arith.constant 0 : index
    %c0_0 = arith.constant 0 : index
    %0 = vector.load %arg1[%c0, %c0_0] : memref<1x128xf32, #tpu.memory_space<vmem>>, vector<1x128xf32>
    %c0_1 = arith.constant 0 : index
    %c0_2 = arith.constant 0 : index
    %1 = vector.load %arg2[%c0_1, %c0_2] : memref<64x1xf32, #tpu.memory_space<vmem>>, vector<64x1xf32>
    %2 = vector.broadcast %1 : vector<64x1xf32> to vector<64x128xf32>
    %3 = vector.broadcast %0 : vector<1x128xf32> to vector<64x128xf32>
    %4 = arith.mulf %2, %3 : vector<64x128xf32>
    %c0_3 = arith.constant 0 : index
    %c0_4 = arith.constant 0 : index
    %5 = vector.load %arg3[%c0_3, %c0_4] : memref<64x1xf32, #tpu.memory_space<vmem>>, vector<64x1xf32>
    %6 = vector.broadcast %5 : vector<64x1xf32> to vector<64x128xf32>
    %7 = arith.addf %4, %6 : vector<64x128xf32>
    %cst = arith.constant 0.000000e+00 : f32
    %8 = vector.broadcast %cst : f32 to vector<64x128xf32>
    %9 = arith.maximumf %7, %8 : vector<64x128xf32>
    %c0_5 = arith.constant 0 : index
    %c0_6 = arith.constant 0 : index
    %10 = vector.load %arg4[%c0_5, %c0_6] : memref<64x64xf32, #tpu.memory_space<vmem>>, vector<64x64xf32>
    %cst_7 = arith.constant dense<0.000000e+00> : vector<64x128xf32>
    %11 = tpu.matmul %10, %9, %cst_7 {dimension_numbers = #tpu.dot_dimension_numbers<[1], [0], [0], [1], [0, 0, 1, 1], [], []>} : vector<64x64xf32>, vector<64x128xf32>, vector<64x128xf32> -> vector<64x128xf32>
    %cst_8 = arith.constant 0.000000e+00 : f32
    %12 = vector.broadcast %cst_8 : f32 to vector<64x128xf32>
    %13 = arith.maximumf %11, %12 : vector<64x128xf32>
    %c0_9 = arith.constant 0 : index
    %c0_10 = arith.constant 0 : index
    %14 = vector.load %arg5[%c0_9, %c0_10] : memref<64x64xf32, #tpu.memory_space<vmem>>, vector<64x64xf32>
    %cst_11 = arith.constant dense<0.000000e+00> : vector<64x128xf32>
    %15 = tpu.matmul %14, %13, %cst_11 {dimension_numbers = #tpu.dot_dimension_numbers<[1], [0], [0], [1], [0, 0, 1, 1], [], []>} : vector<64x64xf32>, vector<64x128xf32>, vector<64x128xf32> -> vector<64x128xf32>
    %cst_12 = arith.constant 0.000000e+00 : f32
    %16 = vector.broadcast %cst_12 : f32 to vector<64x128xf32>
    %17 = arith.maximumf %15, %16 : vector<64x128xf32>
    %c0_13 = arith.constant 0 : index
    %c0_14 = arith.constant 0 : index
    %18 = vector.load %arg6[%c0_13, %c0_14] : memref<64x1xf32, #tpu.memory_space<vmem>>, vector<64x1xf32>
    %19 = vector.broadcast %18 : vector<64x1xf32> to vector<64x128xf32>
    %20 = arith.mulf %19, %17 : vector<64x128xf32>
    %cst_15 = arith.constant dense<0.000000e+00> : vector<128xf32>
    %21 = vector.multi_reduction <add>, %20, %cst_15 [0] : vector<64x128xf32> to vector<128xf32>
    %22 = vector.shape_cast %21 : vector<128xf32> to vector<1x128xf32>
    %c0_16 = arith.constant 0 : index
    %c0_17 = arith.constant 0 : index
    %23 = vector.load %arg7[%c0_16, %c0_17] : memref<1x128xf32, #tpu.memory_space<vmem>>, vector<1x128xf32>
    tpu.vector_store %arg7[%c0_16, %c0_17], %22 {strides = array<i32>} : memref<1x128xf32, #tpu.memory_space<vmem>>, vector<1x128xf32>,
    return
  }
  func.func @transform_0(%arg0: i32) -> (i32, i32) {
    %c0_i32 = arith.constant 0 : i32
    %c0_i32_0 = arith.constant 0 : i32
    return %c0_i32, %arg0 : i32, i32
  }
  func.func @transform_1(%arg0: i32) -> (i32, i32) {
    %c0_i32 = arith.constant 0 : i32
    %c0_i32_0 = arith.constant 0 : i32
    %c0_i32_1 = arith.constant 0 : i32
    return %c0_i32, %c0_i32_0 : i32, i32
  }
  func.func @transform_2(%arg0: i32) -> (i32, i32) {
    %c0_i32 = arith.constant 0 : i32
    %c0_i32_0 = arith.constant 0 : i32
    %c0_i32_1 = arith.constant 0 : i32
    return %c0_i32, %c0_i32_0 : i32, i32
  }
  func.func @transform_3(%arg0: i32) -> (i32, i32) {
    %c0_i32 = arith.constant 0 : i32
    %c0_i32_0 = arith.constant 0 : i32
    %c0_i32_1 = arith.constant 0 : i32
    return %c0_i32, %c0_i32_0 : i32, i32
  }
  func.func @transform_4(%arg0: i32) -> (i32, i32) {
    %c0_i32 = arith.constant 0 : i32
    %c0_i32_0 = arith.constant 0 : i32
    %c0_i32_1 = arith.constant 0 : i32
    return %c0_i32, %c0_i32_0 : i32, i32
  }
  func.func @transform_5(%arg0: i32) -> (i32, i32) {
    %c0_i32 = arith.constant 0 : i32
    %c0_i32_0 = arith.constant 0 : i32
    %c0_i32_1 = arith.constant 0 : i32
    return %c0_i32, %c0_i32_0 : i32, i32
  }
  func.func @transform_6(%arg0: i32) -> (i32, i32) {
    %c0_i32 = arith.constant 0 : i32
    %c0_i32_0 = arith.constant 0 : i32
    return %c0_i32, %arg0 : i32, i32
  }
}

</mosaic_0001>

<llo_original>
// kernel: tpu_custom_call.1
$region0: #{tpu_custom_call.1}
  #allocation0 [shape = 'u32[]', space=smem, size = 0x4, offset = 0x4, fixed_abs, tag = 'smem constant byte address 0x4 - core index']
  #allocation1 [shape = 'u32[72,128]{1,0:T(1,128)}', space=vmem, size = 0x9000, scoped, tag = 'internal scratch']
  %s0 = inlined_call_operand.vmem [shape: f32[1,128], index: 0, kind: input, shape index: {}]
  %s1 = inlined_call_operand.vmem [shape: f32[64,1], index: 1, kind: input, shape index: {}]
  %s2 = inlined_call_operand.vmem [shape: f32[64,1], index: 2, kind: input, shape index: {}]
  %s3 = inlined_call_operand.vmem [shape: f32[64,64], index: 3, kind: input, shape index: {}]
  %s4 = inlined_call_operand.vmem [shape: f32[64,64], index: 4, kind: input, shape index: {}]
  %s5 = inlined_call_operand.vmem [shape: f32[64,1], index: 5, kind: input, shape index: {}]
  %s6 = inlined_call_operand.hbm [shape: f32[1,128], index: 6, kind: output, shape index: {}]
  %s7 = sld [smem:[#allocation0]]
  $region34: #{tpu_custom_call.1} parent=0
    _
  %s9 = ssub.s32 1, %s7
  %s10 = scalar_select 0, %s9, %s7
  $region1: #{tpu_custom_call.1} parent=0
    #allocation2 [shape = 'u8[512]{0}', space=vmem, size = 0x400, scoped, tag = 'output window, operand 0, single buffered']
    #allocation3 [shape = 's32[1]{0}', space=sflag, size = 0x4, scoped, tag = 'scoped memory for tpu_custom_call.1']
    %11 = vsyncpa [#allocation3], 0
    // Predicated region
    $region2: #{tpu_custom_call.1} parent=1 // pred_check
      _
    $region3: #{tpu_custom_call.1} parent=1 // pred_check_branch
      %13 = sbr.rel (0) target = $region5
    $region4: #{tpu_custom_call.1} parent=1 // pred_region
      _
    $region5: #{tpu_custom_call.1} parent=1 // pred_fallthru
      _
    // Predicated region
    $region6: #{tpu_custom_call.1} parent=1 // pred_check
      _
    $region7: #{tpu_custom_call.1} parent=1 // pred_check_branch
      %15 = sbr.rel (0) target = $region9
    $region8: #{tpu_custom_call.1} parent=1 // pred_region
      _
    $region9: #{tpu_custom_call.1} parent=1 // pred_fallthru
      _
    // Predicated region
    $region10: #{tpu_custom_call.1} parent=1 // pred_check
      _
    $region11: #{tpu_custom_call.1} parent=1 // pred_check_branch
      %17 = sbr.rel (0) target = $region13
    $region12: #{tpu_custom_call.1} parent=1 // pred_region
      _
    $region13: #{tpu_custom_call.1} parent=1 // pred_fallthru
      _
    // Predicated region
    $region14: #{tpu_custom_call.1} parent=1 // pred_check
      _
    $region15: #{tpu_custom_call.1} parent=1 // pred_check_branch
      %19 = sbr.rel (0) target = $region17
    $region16: #{tpu_custom_call.1} parent=1 // pred_region
      _
    $region17: #{tpu_custom_call.1} parent=1 // pred_fallthru
      _
    // Predicated region
    $region18: #{tpu_custom_call.1} parent=1 // pred_check
      _
    $region19: #{tpu_custom_call.1} parent=1 // pred_check_branch
      %21 = sbr.rel (0) target = $region21
    $region20: #{tpu_custom_call.1} parent=1 // pred_region
      _
    $region21: #{tpu_custom_call.1} parent=1 // pred_fallthru
      _
    // Predicated region
    $region22: #{tpu_custom_call.1} parent=1 // pred_check
      _
    $region23: #{tpu_custom_call.1} parent=1 // pred_check_branch
      %23 = sbr.rel (0) target = $region25
    $region24: #{tpu_custom_call.1} parent=1 // pred_region
      _
    $region25: #{tpu_custom_call.1} parent=1 // pred_fallthru
      _
    %v24 = vld [vmem:[%s0] sm:$0x1]
    %v25 = vld [vmem:[%s1] sm:$0xff]
    %v26 = vld [vmem:[%s1 + $0x8] sm:$0xff]
    %v27 = vld [vmem:[%s1 + $0x10] sm:$0xff]
    %v28 = vld [vmem:[%s1 + $0x18] sm:$0xff]
    %v29 = vld [vmem:[%s1 + $0x20] sm:$0xff]
    %v30 = vld [vmem:[%s1 + $0x28] sm:$0xff]
    %v31 = vld [vmem:[%s1 + $0x30] sm:$0xff]
    %v32 = vld [vmem:[%s1 + $0x38] sm:$0xff]
    %34 = vset.pattern.permute.xlu0 0
    %35 = vperm.xlu0 %34, %v25
    %v36 = vpop.permute.xlu0 %35
    %39 = vset.pattern.permute.xlu0 0
    %40 = vperm.xlu0 %39, %v26
    %v41 = vpop.permute.xlu0 %40
    %44 = vset.pattern.permute.xlu0 0
    %45 = vperm.xlu0 %44, %v27
    %v46 = vpop.permute.xlu0 %45
    %49 = vset.pattern.permute.xlu0 0
    %50 = vperm.xlu0 %49, %v28
    %v51 = vpop.permute.xlu0 %50
    %54 = vset.pattern.permute.xlu0 0
    %55 = vperm.xlu0 %54, %v29
    %v56 = vpop.permute.xlu0 %55
    %59 = vset.pattern.permute.xlu0 0
    %60 = vperm.xlu0 %59, %v30
    %v61 = vpop.permute.xlu0 %60
    %64 = vset.pattern.permute.xlu0 0
    %65 = vperm.xlu0 %64, %v31
    %v66 = vpop.permute.xlu0 %65
    %69 = vset.pattern.permute.xlu0 0
    %70 = vperm.xlu0 %69, %v32
    %v71 = vpop.permute.xlu0 %70
    %v74 = vperm.slane %v24, 0
    %v76 = vmul.f32 %v36, %v74
    %v77 = vmul.f32 %v41, %v74
    %v78 = vmul.f32 %v46, %v74
    %v79 = vmul.f32 %v51, %v74
    %v80 = vmul.f32 %v56, %v74
    %v81 = vmul.f32 %v61, %v74
    %v82 = vmul.f32 %v66, %v74
    %v83 = vmul.f32 %v71, %v74
    %v84 = vld [vmem:[%s2] sm:$0xff]
    %v85 = vld [vmem:[%s2 + $0x8] sm:$0xff]
    %v86 = vld [vmem:[%s2 + $0x10] sm:$0xff]
    %v87 = vld [vmem:[%s2 + $0x18] sm:$0xff]
    %v88 = vld [vmem:[%s2 + $0x20] sm:$0xff]
    %v89 = vld [vmem:[%s2 + $0x28] sm:$0xff]
    %v90 = vld [vmem:[%s2 + $0x30] sm:$0xff]
    %v91 = vld [vmem:[%s2 + $0x38] sm:$0xff]
    %93 = vset.pattern.permute.xlu0 0
    %94 = vperm.xlu0 %93, %v84
    %v95 = vpop.permute.xlu0 %94
    %98 = vset.pattern.permute.xlu0 0
    %99 = vperm.xlu0 %98, %v85
    %v100 = vpop.permute.xlu0 %99
    %103 = vset.pattern.permute.xlu0 0
    %104 = vperm.xlu0 %103, %v86
    %v105 = vpop.permute.xlu0 %104
    %108 = vset.pattern.permute.xlu0 0
    %109 = vperm.xlu0 %108, %v87
    %v110 = vpop.permute.xlu0 %109
    %113 = vset.pattern.permute.xlu0 0
    %114 = vperm.xlu0 %113, %v88
    %v115 = vpop.permute.xlu0 %114
    %118 = vset.pattern.permute.xlu0 0
    %119 = vperm.xlu0 %118, %v89
    %v120 = vpop.permute.xlu0 %119
    %123 = vset.pattern.permute.xlu0 0
    %124 = vperm.xlu0 %123, %v90
    %v125 = vpop.permute.xlu0 %124
    %128 = vset.pattern.permute.xlu0 0
    %129 = vperm.xlu0 %128, %v91
    %v130 = vpop.permute.xlu0 %129
    %v132 = vadd.f32 %v76, %v95
    %v133 = vadd.f32 %v77, %v100
    %v134 = vadd.f32 %v78, %v105
    %v135 = vadd.f32 %v79, %v110
    %v136 = vadd.f32 %v80, %v115
    %v137 = vadd.f32 %v81, %v120
    %v138 = vadd.f32 %v82, %v125
    %v139 = vadd.f32 %v83, %v130
    %v140 = vmax.f32 %v132, 0.0
    %v141 = vmax.f32 %v133, 0.0
    %v142 = vmax.f32 %v134, 0.0
    %v143 = vmax.f32 %v135, 0.0
    %v144 = vmax.f32 %v136, 0.0
    %v145 = vmax.f32 %v137, 0.0
    %v146 = vmax.f32 %v138, 0.0
    %v147 = vmax.f32 %v139, 0.0
    %v148 = vld [vmem:[%s3] sm:$0xff]
    %v149 = vld [vmem:[%s3 + $0x8] sm:$0xff]
    %v150 = vld [vmem:[%s3 + $0x10] sm:$0xff]
    %v151 = vld [vmem:[%s3 + $0x18] sm:$0xff]
    %v152 = vld [vmem:[%s3 + $0x20] sm:$0xff]
    %v153 = vld [vmem:[%s3 + $0x28] sm:$0xff]
    %v154 = vld [vmem:[%s3 + $0x30] sm:$0xff]
    %v155 = vld [vmem:[%s3 + $0x38] sm:$0xff]
    %vm156 = vcmask 523264
    %v158 = vsel %vm156, %v148, 0
    %v161 = vsel %vm156, %v149, 0
    %v164 = vsel %vm156, %v150, 0
    %v167 = vsel %vm156, %v151, 0
    %v170 = vsel %vm156, %v152, 0
    %v173 = vsel %vm156, %v153, 0
    %v176 = vsel %vm156, %v154, 0
    %v179 = vsel %vm156, %v155, 0
    %181 = vmatpush.msra.mxu0 0.0
    %182 = vmatpush.msra.mxu0 0.0
    %183 = vmatpush.msra.mxu0 0.0
    %184 = vmatpush.msra.mxu0 0.0
    %185 = vmatpush.msra.mxu0 0.0
    %186 = vmatpush.msra.mxu0 0.0
    %187 = vmatpush.msra.mxu0 0.0
    %188 = vmatpush.msra.mxu0 0.0
    %189 = vmatpush.msra.mxu0 %v147
    %190 = vmatpush.msra.mxu0 %v146
    %191 = vmatpush.msra.mxu0 %v145
    %192 = vmatpush.msra.mxu0 %v144
    %193 = vmatpush.msra.mxu0 %v143
    %194 = vmatpush.msra.mxu0 %v142
    %195 = vmatpush.msra.mxu0 %v141
    %196 = vmatpush.msra.mxu0 %v140
    %197 = vmatmul.f32.gmra.mxu0 %v158
    %v198 = vpop.f32.mrf.mxu0
    %v199 = vadd.f32 0.0, %v198
    %200 = vmatmul.f32.gmra.mxu0 %v161
    %v201 = vpop.f32.mrf.mxu0
    %v202 = vadd.f32 0.0, %v201
    %203 = vmatmul.f32.gmra.mxu0 %v164
    %v204 = vpop.f32.mrf.mxu0
    %v205 = vadd.f32 0.0, %v204
    %206 = vmatmul.f32.gmra.mxu0 %v167
    %v207 = vpop.f32.mrf.mxu0
    %v208 = vadd.f32 0.0, %v207
    %209 = vmatmul.f32.gmra.mxu0 %v170
    %v210 = vpop.f32.mrf.mxu0
    %v211 = vadd.f32 0.0, %v210
    %212 = vmatmul.f32.gmra.mxu0 %v173
    %v213 = vpop.f32.mrf.mxu0
    %v214 = vadd.f32 0.0, %v213
    %215 = vmatmul.f32.gmra.mxu0 %v176
    %v216 = vpop.f32.mrf.mxu0
    %v217 = vadd.f32 0.0, %v216
    %218 = vmatmul.f32.gmra.mxu0 %v179
    %v219 = vpop.f32.mrf.mxu0
    %v220 = vadd.f32 0.0, %v219
    %221 = vdwg.mxu0
    %v222 = vmax.f32 %v199, 0.0
    %v223 = vmax.f32 %v202, 0.0
    %v224 = vmax.f32 %v205, 0.0
    %v225 = vmax.f32 %v208, 0.0
    %v226 = vmax.f32 %v211, 0.0
    %v227 = vmax.f32 %v214, 0.0
    %v228 = vmax.f32 %v217, 0.0
    %v229 = vmax.f32 %v220, 0.0
    %v230 = vld [vmem:[%s4] sm:$0xff]
    %v231 = vld [vmem:[%s4 + $0x8] sm:$0xff]
    %v232 = vld [vmem:[%s4 + $0x10] sm:$0xff]
    %v233 = vld [vmem:[%s4 + $0x18] sm:$0xff]
    %v234 = vld [vmem:[%s4 + $0x20] sm:$0xff]
    %v235 = vld [vmem:[%s4 + $0x28] sm:$0xff]
    %v236 = vld [vmem:[%s4 + $0x30] sm:$0xff]
    %v237 = vld [vmem:[%s4 + $0x38] sm:$0xff]
    %v239 = vsel %vm156, %v230, 0
    %v242 = vsel %vm156, %v231, 0
    %v245 = vsel %vm156, %v232, 0
    %v248 = vsel %vm156, %v233, 0
    %v251 = vsel %vm156, %v234, 0
    %v254 = vsel %vm156, %v235, 0
    %v257 = vsel %vm156, %v236, 0
    %v260 = vsel %vm156, %v237, 0
    %262 = vmatpush.msra.mxu0 0.0
    %263 = vmatpush.msra.mxu0 0.0
    %264 = vmatpush.msra.mxu0 0.0
    %265 = vmatpush.msra.mxu0 0.0
    %266 = vmatpush.msra.mxu0 0.0
    %267 = vmatpush.msra.mxu0 0.0
    %268 = vmatpush.msra.mxu0 0.0
    %269 = vmatpush.msra.mxu0 0.0
    %270 = vmatpush.msra.mxu0 %v229
    %271 = vmatpush.msra.mxu0 %v228
    %272 = vmatpush.msra.mxu0 %v227
    %273 = vmatpush.msra.mxu0 %v226
    %274 = vmatpush.msra.mxu0 %v225
    %275 = vmatpush.msra.mxu0 %v224
    %276 = vmatpush.msra.mxu0 %v223
    %277 = vmatpush.msra.mxu0 %v222
    %278 = vmatmul.f32.gmra.mxu0 %v239
    %v279 = vpop.f32.mrf.mxu0
    %v280 = vadd.f32 0.0, %v279
    %281 = vmatmul.f32.gmra.mxu0 %v242
    %v282 = vpop.f32.mrf.mxu0
    %v283 = vadd.f32 0.0, %v282
    %284 = vmatmul.f32.gmra.mxu0 %v245
    %v285 = vpop.f32.mrf.mxu0
    %v286 = vadd.f32 0.0, %v285
    %287 = vmatmul.f32.gmra.mxu0 %v248
    %v288 = vpop.f32.mrf.mxu0
    %v289 = vadd.f32 0.0, %v288
    %290 = vmatmul.f32.gmra.mxu0 %v251
    %v291 = vpop.f32.mrf.mxu0
    %v292 = vadd.f32 0.0, %v291
    %293 = vmatmul.f32.gmra.mxu0 %v254
    %v294 = vpop.f32.mrf.mxu0
    %v295 = vadd.f32 0.0, %v294
    %296 = vmatmul.f32.gmra.mxu0 %v257
    %v297 = vpop.f32.mrf.mxu0
    %v298 = vadd.f32 0.0, %v297
    %299 = vmatmul.f32.gmra.mxu0 %v260
    %v300 = vpop.f32.mrf.mxu0
    %v301 = vadd.f32 0.0, %v300
    %302 = vdwg.mxu0
    %v303 = vmax.f32 %v280, 0.0
    %v304 = vmax.f32 %v283, 0.0
    %v305 = vmax.f32 %v286, 0.0
    %v306 = vmax.f32 %v289, 0.0
    %v307 = vmax.f32 %v292, 0.0
    %v308 = vmax.f32 %v295, 0.0
    %v309 = vmax.f32 %v298, 0.0
    %v310 = vmax.f32 %v301, 0.0
    %v311 = vld [vmem:[%s5] sm:$0xff]
    %v312 = vld [vmem:[%s5 + $0x8] sm:$0xff]
    %v313 = vld [vmem:[%s5 + $0x10] sm:$0xff]
    %v314 = vld [vmem:[%s5 + $0x18] sm:$0xff]
    %v315 = vld [vmem:[%s5 + $0x20] sm:$0xff]
    %v316 = vld [vmem:[%s5 + $0x28] sm:$0xff]
    %v317 = vld [vmem:[%s5 + $0x30] sm:$0xff]
    %v318 = vld [vmem:[%s5 + $0x38] sm:$0xff]
    %320 = vset.pattern.permute.xlu0 0
    %321 = vperm.xlu0 %320, %v311
    %v322 = vpop.permute.xlu0 %321
    %325 = vset.pattern.permute.xlu0 0
    %326 = vperm.xlu0 %325, %v312
    %v327 = vpop.permute.xlu0 %326
    %330 = vset.pattern.permute.xlu0 0
    %331 = vperm.xlu0 %330, %v313
    %v332 = vpop.permute.xlu0 %331
    %335 = vset.pattern.permute.xlu0 0
    %336 = vperm.xlu0 %335, %v314
    %v337 = vpop.permute.xlu0 %336
    %340 = vset.pattern.permute.xlu0 0
    %341 = vperm.xlu0 %340, %v315
    %v342 = vpop.permute.xlu0 %341
    %345 = vset.pattern.permute.xlu0 0
    %346 = vperm.xlu0 %345, %v316
    %v347 = vpop.permute.xlu0 %346
    %350 = vset.pattern.permute.xlu0 0
    %351 = vperm.xlu0 %350, %v317
    %v352 = vpop.permute.xlu0 %351
    %355 = vset.pattern.permute.xlu0 0
    %356 = vperm.xlu0 %355, %v318
    %v357 = vpop.permute.xlu0 %356
    %v359 = vmul.f32 %v322, %v303
    %v360 = vmul.f32 %v327, %v304
    %v361 = vmul.f32 %v332, %v305
    %v362 = vmul.f32 %v337, %v306
    %v363 = vmul.f32 %v342, %v307
    %v364 = vmul.f32 %v347, %v308
    %v365 = vmul.f32 %v352, %v309
    %v366 = vmul.f32 %v357, %v310
    %v367 = vadd.f32 %v359, %v360
    %v368 = vadd.f32 %v367, %v361
    %v369 = vadd.f32 %v368, %v362
    %v370 = vadd.f32 %v369, %v363
    %v371 = vadd.f32 %v370, %v364
    %v372 = vadd.f32 %v371, %v365
    %v373 = vadd.f32 %v372, %v366
    %v374 = vrot.slane %v373, 4
    %v375 = vadd.f32 %v373, %v374
    %v376 = vrot.slane %v375, 2
    %v377 = vadd.f32 %v375, %v376
    %v378 = vrot.slane %v377, 1
    %v379 = vadd.f32 %v377, %v378
    %380 = vst [vmem:[#allocation2] sm:$0x1] %v379
    // Predicated region
    $region26: #{tpu_custom_call.1} parent=1 // pred_check
      _
    $region27: #{tpu_custom_call.1} parent=1 // pred_check_branch
      %382 = sbr.rel (0) target = $region29
    $region28: #{tpu_custom_call.1} parent=1 // pred_region
      %384 = vsyncadd [#allocation3], 0
      %s386 = sshll.u32 [#allocation2], 4
      %s387 = int_to_ptr.vmem [resolvable:$true] %s386
      %s388 = sshll.u32 %s6, 4
      %s389 = int_to_ptr.hbm [resolvable:$true] %s388
      %391 = dma.vmem_to_hbm [thread:$0]  %s387, 16, %s389, [#allocation3]
    $region29: #{tpu_custom_call.1} parent=1 // pred_fallthru
      _
    // Predicated region
    $region30: #{tpu_custom_call.1} parent=1 // pred_check
      _
    $region31: #{tpu_custom_call.1} parent=1 // pred_check_branch
      %393 = sbr.rel (0) target = $region33
    $region32: #{tpu_custom_call.1} parent=1 // pred_region
      %395 = dma.done [#allocation3], 16
    $region33: #{tpu_custom_call.1} parent=1 // pred_fallthru
      _
    %396 = vsyncpa [#allocation3], 1

</llo_original>
